<compile_context>
chip_gen: v6e
topology: v6e:2x2x1
jax: 0.10.0
libtpu: 0.0.40
codegen_flags: <defaults>
</compile_context>

<pallas_src>
import functools

import numpy as np

import jax
import jax.numpy as jnp
from jax.experimental import pallas as pl
from jax.experimental.pallas import tpu as pltpu


# ----------------------------------------------------------------------------
# Kernel 1: multi-layer block-sparse LightGCN propagation (transposed layout).
#   prefetch: kidx/jidx/first/last (SMEM int32, one entry per nonzero G tile)
#   inputs  : et0  (D, Npad) f32 HBM (pl.ANY)   -- E0^T, copied once
#             gtl  (ntiles, tile, tile) bf16    -- compacted nonzero G tiles
#   output  : light_out^T (D, Npad) f32 = mean(E0..EL)^T
#   scratch : e   (D, 2*Npad) bf16  -- ping-pong E_l^T / E_{l+1}^T
#             sum (D, Npad)  f32    -- running sum of E0..E_l
#   out_ref itself is the f32 MXU accumulator for each column block.
# ----------------------------------------------------------------------------
def _propagate_kernel(kidx_ref, jidx_ref, first_ref, last_ref,
                      et0_hbm, gt_ref, out_ref, e_ref, sum_ref,
                      *, tile, npad, inv_cnt):
    l = pl.program_id(0)          # GCN layer
    t = pl.program_id(1)          # nonzero-tile index (column-block-major)

    # One-time staging of E0^T: HBM -> f32 running-sum scratch, then a single
    # f32->bf16 cast into the layer-0 half of the ping-pong E buffer.
    @pl.when((l == 0) & (t == 0))
    def _():
        pltpu.sync_copy(et0_hbm, sum_ref)
        e_ref[:, pl.ds(0, npad)] = sum_ref[...].astype(jnp.bfloat16)

    k = kidx_ref[t]               # row-block of G  == column-block of E_l^T
    j = jidx_ref[t]               # col-block of G  == output column block

    # out_ref's block index (0, j) is constant across this column block's tile
    # run, so the output buffer doubles as the f32 accumulator.
    @pl.when(first_ref[t] == 1)
    def _():
        out_ref[...] = jnp.zeros_like(out_ref)

    # E_{l+1}^T[:, j-tile] += E_l^T[:, k-tile] @ G[k-tile, j-tile]
    # (G symmetric => this equals the needed G^T tile); bf16 MXU, f32 acc.
    rd = (l % 2) * npad                               # ping-pong read offset
    kcol = pl.multiple_of(rd + k * tile, tile)
    lhs = e_ref[:, pl.ds(kcol, tile)]                 # bf16 (D, tile)
    out_ref[...] += jnp.dot(lhs, gt_ref[0],
                            preferred_element_type=jnp.float32)

    # End of this column block: commit E_{l+1} tile (single bf16 cast), update
    # the f32 layer sum, and leave light_out^T = sum/(L+1) in out_ref.
    # Intermediate-layer writebacks of the same output block are overwritten
    # by the final layer (harmless).
    @pl.when(last_ref[t] == 1)
    def _():
        new_tile = out_ref[...]                        # f32 E_{l+1} tile
        wr = ((l + 1) % 2) * npad                      # ping-pong write offset
        jcol = pl.multiple_of(wr + j * tile, tile)
        scol = pl.multiple_of(j * tile, tile)
        e_ref[:, pl.ds(jcol, tile)] = new_tile.astype(jnp.bfloat16)
        s = sum_ref[:, pl.ds(scol, tile)] + new_tile
        sum_ref[:, pl.ds(scol, tile)] = s
        out_ref[...] = s * inv_cnt


def lightgcn_propagate(g_tiles, kidx, jidx, first, last, et0, n_layers,
                       *, npad, tile, g_buffers=None, vmem_limit_bytes=None):
    d = et0.shape[0]
    ntiles = g_tiles.shape[0]
    assert n_layers >= 1 and ntiles >= 1
    assert d % 8 == 0 and tile % 128 == 0 and npad % tile == 0

    if vmem_limit_bytes is None:
        # Derive the scoped VMEM limit from the actual buffer set.
        need = ((g_buffers or 2) * tile * tile * 2     # streamed bf16 G tiles
                + d * 2 * npad * 2                     # bf16 E^T ping-pong
                + d * npad * 4                         # f32 running layer sum
                + 2 * d * tile * 4)                    # f32 output tile (x2)
        vmem_limit_bytes = max(need + (8 << 20), 16 << 20)

    g_kwargs = {}
    if g_buffers is not None and g_buffers != 2:
        g_kwargs["pipeline_mode"] = pl.Buffered(g_buffers)   # e.g. 3 on v5e
    g_spec = pl.BlockSpec((1, tile, tile), lambda l, t, *_: (t, 0, 0), **g_kwargs)

    kernel = functools.partial(_propagate_kernel, tile=tile, npad=npad,
                               inv_cnt=1.0 / float(n_layers + 1))
    return pl.pallas_call(
        kernel,
        out_shape=jax.ShapeDtypeStruct((d, npad), jnp.float32),
        grid_spec=pltpu.PrefetchScalarGridSpec(
            num_scalar_prefetch=4,
            grid=(n_layers, ntiles),
            in_specs=[
                pl.BlockSpec(memory_space=pl.ANY),   # E0^T stays in HBM
                g_spec,                              # compacted G tile stream
            ],
            out_specs=pl.BlockSpec(
                (d, tile), lambda l, t, kidx, jidx, first, last: (0, jidx[t])),
            scratch_shapes=[
                pltpu.VMEM((d, 2 * npad), jnp.bfloat16),   # E^T ping-pong
                pltpu.VMEM((d, npad), jnp.float32),        # running layer sum
            ],
        ),
        compiler_params=pltpu.CompilerParams(
            # Both axes carry the resident-scratch / output-accumulator
            # dependency -> sequential.
            dimension_semantics=("arbitrary", "arbitrary"),
            vmem_limit_bytes=vmem_limit_bytes,
        ),
    )(kidx, jidx, first, last, et0, g_tiles)


# ----------------------------------------------------------------------------
# Kernel 2: scoring  gamma = sum(users_emb * items_emb, axis=D)
#   Transposed inputs (D, Bpad) -> lane-dense (1, Bpad) output.
# ----------------------------------------------------------------------------
def _score_kernel(u_ref, i_ref, out_ref):
    out_ref[...] = jnp.sum(u_ref[...] * i_ref[...], axis=0, keepdims=True)


def lightgcn_score(users_emb_t, items_emb_t, *, tb=128):
    d, b = users_emb_t.shape           # b already padded to a multiple of tb
    assert b % tb == 0
    return pl.pallas_call(
        _score_kernel,
        out_shape=jax.ShapeDtypeStruct((1, b), jnp.float32),
        grid_spec=pltpu.PrefetchScalarGridSpec(
            num_scalar_prefetch=0,
            grid=(b // tb,),
            in_specs=[pl.BlockSpec((d, tb), lambda i: (0, i)),
                      pl.BlockSpec((d, tb), lambda i: (0, i))],
            out_specs=pl.BlockSpec((1, tb), lambda i: (0, i)),
        ),
        compiler_params=pltpu.CompilerParams(
            dimension_semantics=("parallel",)),
    )(users_emb_t, items_emb_t)


# ----------------------------------------------------------------------------
# One-time host-side graph preparation (NOT jitted, runs once per graph).
# ----------------------------------------------------------------------------
def prepare_graph_tiles(graph, tile=1024):
    """Pad G to a multiple of `tile`, keep only nonzero (k, j) tiles in a
    contiguous bf16 (ntiles, tile, tile) array (one fully contiguous DMA per
    tile), and emit int32 scalar-prefetch metadata ordered column-block-major
    so each output tile stays VMEM-resident across its accumulation run.
    LightGCN's normalized adjacency D^-1/2 A D^-1/2 is symmetric, so the G
    tiles double as G^T tiles (no transpose materialized)."""
    g = np.asarray(graph, dtype=np.float32)
    n = g.shape[0]
    npad = ((n + tile - 1) // tile) * tile
    gp = np.zeros((npad, npad), dtype=np.float32)
    gp[:n, :n] = g
    nb = npad // tile
    blocks = gp.reshape(nb, tile, nb, tile).transpose(0, 2, 1, 3)  # [k, j, tk, tn]
    nz = np.abs(blocks).sum(axis=(2, 3)) > 0.0                     # [k, j]
    # Every column block needs >= 1 tile so the kernel still writes its
    # E_{l+1} / light_out tiles (isolated or padded nodes propagate zeros).
    for j in range(nb):
        if not nz[:, j].any():
            nz[0, j] = True
    kidx, jidx, first, last, tiles = [], [], [], [], []
    for j in range(nb):
        ks = np.nonzero(nz[:, j])[0]
        for s, k in enumerate(ks):
            kidx.append(int(k))
            jidx.append(int(j))
            first.append(1 if s == 0 else 0)
            last.append(1 if s == len(ks) - 1 else 0)
            tiles.append(blocks[k, j])
    g_tiles = jnp.asarray(np.stack(tiles, axis=0), dtype=jnp.bfloat16)
    meta = tuple(jnp.asarray(np.asarray(a, dtype=np.int32))
                 for a in (kidx, jidx, first, last))
    return (g_tiles,) + meta + (npad,)


# ----------------------------------------------------------------------------
# Full forward wrapper (padding / gathers are XLA glue; all matmuls and
# reductions run in the Pallas kernels).
# ----------------------------------------------------------------------------
@functools.partial(jax.jit,
                   static_argnames=("n_users", "n_layers", "npad", "tile", "tb"))
def lightgcn_forward(g_tiles, kidx, jidx, first, last,
                     user_emb, item_emb, users, items,
                     *, n_users, n_layers, npad, tile, tb=128):
    n = user_emb.shape[0] + item_emb.shape[0]
    all_emb = jnp.concatenate([user_emb, item_emb], axis=0)           # (N, D)
    et0 = jnp.pad(all_emb, ((0, npad - n), (0, 0))).T                 # (D, Npad) f32

    light_t = lightgcn_propagate(g_tiles, kidx, jidx, first, last, et0,
                                 n_layers, npad=npad, tile=tile)      # (D, Npad)

    # Column gathers on the transposed layout: no O(N*D) transpose of the full
    # light_out, and the score kernel stays lane-dense.
    users_t = jnp.take(light_t, users, axis=1)                        # (D, B)
    items_t = jnp.take(light_t, n_users + items, axis=1)              # (D, B)

    b = users.shape[0]
    bpad = ((b + tb - 1) // tb) * tb
    users_t = jnp.pad(users_t, ((0, 0), (0, bpad - b)))
    items_t = jnp.pad(items_t, ((0, 0), (0, bpad - b)))
    gamma = lightgcn_score(users_t, items_t, tb=tb)                   # (1, Bpad)
    return gamma[0, :b]


# ----------------------------------------------------------------------------
# Deterministic parameter / graph construction
# ----------------------------------------------------------------------------
def build_graph(n_users, m_items, key):
    """Dense symmetric-normalized bipartite adjacency (D^-1/2 A D^-1/2)."""
    n = n_users + m_items
    r = jax.random.bernoulli(key, p=0.05, shape=(n_users, m_items)).astype(jnp.float32)
    adj = jnp.zeros((n, n), dtype=jnp.float32)
    adj = adj.at[:n_users, n_users:].set(r)
    adj = adj.at[n_users:, :n_users].set(r.T)
    deg = adj.sum(axis=1)
    d_inv_sqrt = jnp.where(deg > 0, jax.lax.rsqrt(jnp.maximum(deg, 1e-12)), 0.0)
    return d_inv_sqrt[:, None] * adj * d_inv_sqrt[None, :]


if __name__ == "__main__":
    # small config consistent with the module (latent_dim_rec=32, 3 GCN layers)
    n_users, m_items = 200, 300          # N = 500 -> padded to 512
    latent_dim = 32                      # config['latent_dim_rec']
    n_layers = 3                         # config['lightGCN_n_layers']
    batch = 8
    tile = 128                           # toy tile: 4x4 tile grid so several
                                         # genuinely-zero G tiles get skipped
                                         # (real runs: 1024-2048, see guidance).

    key = jax.random.PRNGKey(0)
    k_u, k_i, k_g, k_us, k_it = jax.random.split(key, 5)

    # nn.init.normal_(std=0.1)
    user_emb = 0.1 * jax.random.normal(k_u, (n_users, latent_dim), dtype=jnp.float32)
    item_emb = 0.1 * jax.random.normal(k_i, (m_items, latent_dim), dtype=jnp.float32)
    graph = build_graph(n_users, m_items, k_g)

    users = jax.random.randint(k_us, (batch,), 0, n_users, dtype=jnp.int32)
    items = jax.random.randint(k_it, (batch,), 0, m_items, dtype=jnp.int32)

    # one-time graph prep (pad, tile, bf16, nonzero-tile compaction)
    g_tiles, kidx, jidx, first, last, npad = prepare_graph_tiles(graph, tile=tile)
    nb = npad // tile
    assert g_tiles.shape[0] < nb * nb, "expected some zero tiles to be skipped"

    gamma = lightgcn_forward(g_tiles, kidx, jidx, first, last,
                             user_emb, item_emb, users, items,
                             n_users=n_users, n_layers=n_layers,
                             npad=npad, tile=tile)
    gamma = jax.block_until_ready(gamma)
    assert gamma.shape == (batch,)

    # --- reference 1: bf16-G / bf16-E matched semantics (tight tolerance) ----
    all_emb = jnp.concatenate([user_emb, item_emb], axis=0)
    g_bf = graph.astype(jnp.bfloat16)
    e = all_emb
    acc = e
    for _ in range(n_layers):
        e = jnp.dot(g_bf, e.astype(jnp.bfloat16), preferred_element_type=jnp.float32)
        acc = acc + e
    light_bf = acc / float(n_layers + 1)
    gamma_bf = jnp.sum(light_bf[:n_users][users] * light_bf[n_users:][items], axis=1)
    assert jnp.allclose(gamma, gamma_bf, atol=2e-3, rtol=2e-3), (gamma, gamma_bf)

    # --- reference 2: original full-f32 semantics (loose tolerance) ----------
    e = all_emb
    acc = e
    for _ in range(n_layers):
        e = graph @ e
        acc = acc + e
    light_f32 = acc / float(n_layers + 1)
    gamma_f32 = jnp.sum(light_f32[:n_users][users] * light_f32[n_users:][items], axis=1)
    assert jnp.allclose(gamma, gamma_f32, atol=2e-2, rtol=2e-2), (gamma, gamma_f32)

    print("KERNEL_OK")
</pallas_src>

<mosaic_0001>
module attributes {stable_mosaic.version = 11 : i64} {
  func.func @_propagate_kernel(%arg0: i32, %arg1: i32, %arg2: memref<11xi32, #tpu.memory_space<smem>>, %arg3: memref<11xi32, #tpu.memory_space<smem>>, %arg4: memref<11xi32, #tpu.memory_space<smem>>, %arg5: memref<11xi32, #tpu.memory_space<smem>>, %arg6: memref<32x512xf32, #tpu.memory_space<any>>, %arg7: memref<1x128x128xbf16, #tpu.memory_space<vmem>>, %arg8: memref<32x128xf32, #tpu.memory_space<vmem>>, %arg9: memref<32x1024xbf16, #tpu.memory_space<vmem>>, %arg10: memref<32x512xf32, #tpu.memory_space<vmem>>) attributes {dimension_semantics = [#tpu.dimension_semantics<arbitrary>, #tpu.dimension_semantics<arbitrary>], iteration_bounds = array<i64: 3, 11>, scalar_prefetch = 4 : i64, scratch_operands = 2 : i64, tpu.core_type = #tpu.core_type<tc>, window_params = [{}, {transform_indices = @transform_1, window_bounds = array<i64: 1, 128, 128>}, {transform_indices = @transform_2, window_bounds = array<i64: 32, 128>}]} {
    %c0_i32 = arith.constant 0 : i32
    %0 = arith.cmpi eq, %arg0, %c0_i32 : i32
    %c0_i32_0 = arith.constant 0 : i32
    %1 = arith.cmpi eq, %arg1, %c0_i32_0 : i32
    %2 = arith.andi %0, %1 : i1
    %3 = arith.extui %2 : i1 to i32
    %c0_i32_1 = arith.constant 0 : i32
    %4 = arith.cmpi ne, %3, %c0_i32_1 : i32
    scf.if %4 {
      "tpu.region"() ({
        %44 = tpu.sem_alloc : memref<!tpu.dma_semaphore, #tpu.memory_space<semaphore_mem>>
        tpu.enqueue_dma source(%arg6 : memref<32x512xf32, #tpu.memory_space<any>>) target(%arg10 : memref<32x512xf32, #tpu.memory_space<vmem>>) target_semaphore(%44 : memref<!tpu.dma_semaphore, #tpu.memory_space<semaphore_mem>>)
        tpu.wait_dma2 semaphore(%44 : memref<!tpu.dma_semaphore, #tpu.memory_space<semaphore_mem>>) src(%arg6 : memref<32x512xf32, #tpu.memory_space<any>>) dst(%arg10 : memref<32x512xf32, #tpu.memory_space<vmem>>)
        tpu.yield
      }) : () -> ()
      %c0_17 = arith.constant 0 : index
      %c0_18 = arith.constant 0 : index
      %41 = vector.load %arg10[%c0_17, %c0_18] : memref<32x512xf32, #tpu.memory_space<vmem>>, vector<32x512xf32>
      %42 = arith.truncf %41 : vector<32x512xf32> to vector<32x512xbf16>
      %c0_19 = arith.constant 0 : index
      %c0_20 = arith.constant 0 : index
      %43 = vector.load %arg9[%c0_19, %c0_20] : memref<32x1024xbf16, #tpu.memory_space<vmem>>, vector<32x512xbf16>
      tpu.vector_store %arg9[%c0_19, %c0_20], %42 {strides = array<i32>} : memref<32x1024xbf16, #tpu.memory_space<vmem>>, vector<32x512xbf16>,
    } else {
    }
    %5 = arith.index_cast %arg1 : i32 to index
    %6 = memref.load %arg2[%5] : memref<11xi32, #tpu.memory_space<smem>>
    %7 = arith.index_cast %arg1 : i32 to index
    %8 = memref.load %arg3[%7] : memref<11xi32, #tpu.memory_space<smem>>
    %9 = arith.index_cast %arg1 : i32 to index
    %10 = memref.load %arg4[%9] : memref<11xi32, #tpu.memory_space<smem>>
    %c1_i32 = arith.constant 1 : i32
    %11 = arith.cmpi eq, %10, %c1_i32 : i32
    %12 = arith.extui %11 : i1 to i32
    %c0_i32_2 = arith.constant 0 : i32
    %13 = arith.cmpi ne, %12, %c0_i32_2 : i32
    scf.if %13 {
      %cst_17 = arith.constant 0.000000e+00 : f32
      %41 = vector.broadcast %cst_17 : f32 to vector<32x128xf32>
      %c0_18 = arith.constant 0 : index
      %c0_19 = arith.constant 0 : index
      %42 = vector.load %arg8[%c0_18, %c0_19] : memref<32x128xf32, #tpu.memory_space<vmem>>, vector<32x128xf32>
      tpu.vector_store %arg8[%c0_18, %c0_19], %41 {strides = array<i32>} : memref<32x128xf32, #tpu.memory_space<vmem>>, vector<32x128xf32>,
    } else {
    }
    %c2_i32 = arith.constant 2 : i32
    %c0_i32_3 = arith.constant 0 : i32
    %14 = arith.cmpi eq, %c2_i32, %c0_i32_3 : i32
    %c1_i32_4 = arith.constant 1 : i32
    %15 = arith.select %14, %c1_i32_4, %c2_i32 : i32
    %16 = arith.remsi %arg0, %15 : i32
    %c0_i32_5 = arith.constant 0 : i32
    %17 = arith.cmpi ne, %16, %c0_i32_5 : i32
    %c0_i32_6 = arith.constant 0 : i32
    %18 = arith.cmpi slt, %16, %c0_i32_6 : i32
    %c0_i32_7 = arith.constant 0 : i32
    %19 = arith.cmpi slt, %15, %c0_i32_7 : i32
    %20 = arith.xori %18, %19 : i1
    %21 = arith.andi %20, %17 : i1
    %22 = arith.addi %16, %15 : i32
    %23 = arith.select %21, %22, %16 : i32
    %c512_i32 = arith.constant 512 : i32
    %24 = arith.muli %23, %c512_i32 : i32
    %c128_i32 = arith.constant 128 : i32
    %25 = arith.muli %6, %c128_i32 : i32
    %26 = arith.addi %24, %25 : i32
    %27 = tpu.assume_multiple %26, 128 : i32
    %c0 = arith.constant 0 : index
    %28 = arith.index_cast %27 : i32 to index
    %29 = vector.load %arg9[%c0, %28] : memref<32x1024xbf16, #tpu.memory_space<vmem>>, vector<32x128xbf16>
    %c0_8 = arith.constant 0 : index
    %c0_9 = arith.constant 0 : index
    %30 = vector.load %arg8[%c0_8, %c0_9] : memref<32x128xf32, #tpu.memory_space<vmem>>, vector<32x128xf32>
    %c0_10 = arith.constant 0 : index
    %c0_11 = arith.constant 0 : index
    %c0_12 = arith.constant 0 : index
    %31 = vector.load %arg7[%c0_10, %c0_11, %c0_12] : memref<1x128x128xbf16, #tpu.memory_space<vmem>>, vector<1x128x128xbf16>
    %32 = vector.shape_cast %31 : vector<1x128x128xbf16> to vector<128x128xbf16>
    %cst = arith.constant dense<0.000000e+00> : vector<32x128xf32>
    %33 = tpu.matmul %29, %32, %cst {dimension_numbers = #tpu.dot_dimension_numbers<[1], [0], [0], [1], [0, 0, 1, 1], [], []>} : vector<32x128xbf16>, vector<128x128xbf16>, vector<32x128xf32> -> vector<32x128xf32>
    %34 = arith.addf %30, %33 : vector<32x128xf32>
    %c0_13 = arith.constant 0 : index
    %c0_14 = arith.constant 0 : index
    %35 = vector.load %arg8[%c0_13, %c0_14] : memref<32x128xf32, #tpu.memory_space<vmem>>, vector<32x128xf32>
    tpu.vector_store %arg8[%c0_13, %c0_14], %34 {strides = array<i32>} : memref<32x128xf32, #tpu.memory_space<vmem>>, vector<32x128xf32>,
    %36 = arith.index_cast %arg1 : i32 to index
    %37 = memref.load %arg5[%36] : memref<11xi32, #tpu.memory_space<smem>>
    %c1_i32_15 = arith.constant 1 : i32
    %38 = arith.cmpi eq, %37, %c1_i32_15 : i32
    %39 = arith.extui %38 : i1 to i32
    %c0_i32_16 = arith.constant 0 : i32
    %40 = arith.cmpi ne, %39, %c0_i32_16 : i32
    scf.if %40 {
      %c0_17 = arith.constant 0 : index
      %c0_18 = arith.constant 0 : index
      %41 = vector.load %arg8[%c0_17, %c0_18] : memref<32x128xf32, #tpu.memory_space<vmem>>, vector<32x128xf32>
      %c1_i32_19 = arith.constant 1 : i32
      %42 = arith.addi %arg0, %c1_i32_19 : i32
      %c2_i32_20 = arith.constant 2 : i32
      %c0_i32_21 = arith.constant 0 : i32
      %43 = arith.cmpi eq, %c2_i32_20, %c0_i32_21 : i32
      %c1_i32_22 = arith.constant 1 : i32
      %44 = arith.select %43, %c1_i32_22, %c2_i32_20 : i32
      %45 = arith.remsi %42, %44 : i32
      %c0_i32_23 = arith.constant 0 : i32
      %46 = arith.cmpi ne, %45, %c0_i32_23 : i32
      %c0_i32_24 = arith.constant 0 : i32
      %47 = arith.cmpi slt, %45, %c0_i32_24 : i32
      %c0_i32_25 = arith.constant 0 : i32
      %48 = arith.cmpi slt, %44, %c0_i32_25 : i32
      %49 = arith.xori %47, %48 : i1
      %50 = arith.andi %49, %46 : i1
      %51 = arith.addi %45, %44 : i32
      %52 = arith.select %50, %51, %45 : i32
      %c512_i32_26 = arith.constant 512 : i32
      %53 = arith.muli %52, %c512_i32_26 : i32
      %c128_i32_27 = arith.constant 128 : i32
      %54 = arith.muli %8, %c128_i32_27 : i32
      %55 = arith.addi %53, %54 : i32
      %56 = tpu.assume_multiple %55, 128 : i32
      %c128_i32_28 = arith.constant 128 : i32
      %57 = arith.muli %8, %c128_i32_28 : i32
      %58 = tpu.assume_multiple %57, 128 : i32
      %59 = arith.truncf %41 : vector<32x128xf32> to vector<32x128xbf16>
      %c0_29 = arith.constant 0 : index
      %60 = arith.index_cast %56 : i32 to index
      %61 = vector.load %arg9[%c0_29, %60] : memref<32x1024xbf16, #tpu.memory_space<vmem>>, vector<32x128xbf16>
      tpu.vector_store %arg9[%c0_29, %60], %59 {strides = array<i32>} : memref<32x1024xbf16, #tpu.memory_space<vmem>>, vector<32x128xbf16>,
      %c0_30 = arith.constant 0 : index
      %62 = arith.index_cast %58 : i32 to index
      %63 = vector.load %arg10[%c0_30, %62] : memref<32x512xf32, #tpu.memory_space<vmem>>, vector<32x128xf32>
      %64 = arith.addf %63, %41 : vector<32x128xf32>
      %c0_31 = arith.constant 0 : index
      %65 = arith.index_cast %58 : i32 to index
      %66 = vector.load %arg10[%c0_31, %65] : memref<32x512xf32, #tpu.memory_space<vmem>>, vector<32x128xf32>
      tpu.vector_store %arg10[%c0_31, %65], %64 {strides = array<i32>} : memref<32x512xf32, #tpu.memory_space<vmem>>, vector<32x128xf32>,
      %cst_32 = arith.constant 2.500000e-01 : f32
      %67 = vector.broadcast %cst_32 : f32 to vector<32x128xf32>
      %68 = arith.mulf %64, %67 : vector<32x128xf32>
      %c0_33 = arith.constant 0 : index
      %c0_34 = arith.constant 0 : index
      %69 = vector.load %arg8[%c0_33, %c0_34] : memref<32x128xf32, #tpu.memory_space<vmem>>, vector<32x128xf32>
      tpu.vector_store %arg8[%c0_33, %c0_34], %68 {strides = array<i32>} : memref<32x128xf32, #tpu.memory_space<vmem>>, vector<32x128xf32>,
    } else {
    }
    return
  }
  func.func @transform_1(%arg0: i32, %arg1: i32, %arg2: memref<11xi32, #tpu.memory_space<smem>>, %arg3: memref<11xi32, #tpu.memory_space<smem>>, %arg4: memref<11xi32, #tpu.memory_space<smem>>, %arg5: memref<11xi32, #tpu.memory_space<smem>>) -> (i32, i32, i32) {
    %c0_i32 = arith.constant 0 : i32
    %c0_i32_0 = arith.constant 0 : i32
    %c0_i32_1 = arith.constant 0 : i32
    return %arg1, %c0_i32, %c0_i32_0 : i32, i32, i32
  }
  func.func @transform_2(%arg0: i32, %arg1: i32, %arg2: memref<11xi32, #tpu.memory_space<smem>>, %arg3: memref<11xi32, #tpu.memory_space<smem>>, %arg4: memref<11xi32, #tpu.memory_space<smem>>, %arg5: memref<11xi32, #tpu.memory_space<smem>>) -> (i32, i32) {
    %0 = arith.index_cast %arg1 : i32 to index
    %1 = memref.load %arg3[%0] : memref<11xi32, #tpu.memory_space<smem>>
    %c0_i32 = arith.constant 0 : i32
    %c0_i32_0 = arith.constant 0 : i32
    return %c0_i32, %1 : i32, i32
  }
}

module attributes {stable_mosaic.version = 11 : i64} {
  func.func @_score_kernel(%arg0: i32, %arg1: memref<32x128xf32, #tpu.memory_space<vmem>>, %arg2: memref<32x128xf32, #tpu.memory_space<vmem>>, %arg3: memref<1x128xf32, #tpu.memory_space<vmem>>) attributes {dimension_semantics = [#tpu.dimension_semantics<parallel>], iteration_bounds = array<i64: 1>, scalar_prefetch = 0 : i64, scratch_operands = 0 : i64, tpu.core_type = #tpu.core_type<tc>, window_params = [{transform_indices = @transform_0, window_bounds = array<i64: 32, 128>}, {transform_indices = @transform_1, window_bounds = array<i64: 32, 128>}, {transform_indices = @transform_2, window_bounds = array<i64: 1, 128>}]} {
    %c0 = arith.constant 0 : index
    %c0_0 = arith.constant 0 : index
    %0 = vector.load %arg1[%c0, %c0_0] : memref<32x128xf32, #tpu.memory_space<vmem>>, vector<32x128xf32>
    %c0_1 = arith.constant 0 : index
    %c0_2 = arith.constant 0 : index
    %1 = vector.load %arg2[%c0_1, %c0_2] : memref<32x128xf32, #tpu.memory_space<vmem>>, vector<32x128xf32>
    %2 = arith.mulf %0, %1 : vector<32x128xf32>
    %cst = arith.constant dense<0.000000e+00> : vector<128xf32>
    %3 = vector.multi_reduction <add>, %2, %cst [0] : vector<32x128xf32> to vector<128xf32>
    %4 = vector.shape_cast %3 : vector<128xf32> to vector<1x128xf32>
    %c0_3 = arith.constant 0 : index
    %c0_4 = arith.constant 0 : index
    %5 = vector.load %arg3[%c0_3, %c0_4] : memref<1x128xf32, #tpu.memory_space<vmem>>, vector<1x128xf32>
    tpu.vector_store %arg3[%c0_3, %c0_4], %4 {strides = array<i32>} : memref<1x128xf32, #tpu.memory_space<vmem>>, vector<1x128xf32>,
    return
  }
  func.func @transform_0(%arg0: i32) -> (i32, i32) {
    %c0_i32 = arith.constant 0 : i32
    %c0_i32_0 = arith.constant 0 : i32
    return %c0_i32, %arg0 : i32, i32
  }
  func.func @transform_1(%arg0: i32) -> (i32, i32) {
    %c0_i32 = arith.constant 0 : i32
    %c0_i32_0 = arith.constant 0 : i32
    return %c0_i32, %arg0 : i32, i32
  }
  func.func @transform_2(%arg0: i32) -> (i32, i32) {
    %c0_i32 = arith.constant 0 : i32
    %c0_i32_0 = arith.constant 0 : i32
    return %c0_i32, %arg0 : i32, i32
  }
}

</mosaic_0001>

<llo_original>
// kernel: lightgcn_forward.3
$region0: #{lightgcn_forward.3}
  #allocation0 [shape = 'u32[]', space=smem, size = 0x4, offset = 0x4, fixed_abs, tag = 'smem constant byte address 0x4 - core index']
  #allocation1 [shape = 'u32[144,128]{1,0:T(1,128)}', space=vmem, size = 0x12000, scoped, tag = 'internal scratch']
  %s0 = inlined_call_operand.vmem [shape: f32[32,128], index: 0, kind: input, shape index: {}]
  %s1 = inlined_call_operand.vmem [shape: f32[32,128], index: 1, kind: input, shape index: {}]
  %s2 = inlined_call_operand.vmem [shape: f32[1,128], index: 2, kind: output, shape index: {}]
  %s3 = sld [smem:[#allocation0]]
  $region18: #{lightgcn_forward.3} parent=0
    _
  %s5 = ssub.s32 1, %s3
  %s6 = scalar_select 0, %s5, %s3
  // Predicated region
  $region2: #{lightgcn_forward.3} parent=0 // pred_check
    _
  $region3: #{lightgcn_forward.3} parent=0 // pred_check_branch
    %8 = sbr.rel (0) target = $region5
  $region4: #{lightgcn_forward.3} parent=0 // pred_region
    _
  $region5: #{lightgcn_forward.3} parent=0 // pred_fallthru
    _
  // Predicated region
  $region6: #{lightgcn_forward.3} parent=0 // pred_check
    _
  $region7: #{lightgcn_forward.3} parent=0 // pred_check_branch
    %10 = sbr.rel (0) target = $region9
  $region8: #{lightgcn_forward.3} parent=0 // pred_region
    _
  $region9: #{lightgcn_forward.3} parent=0 // pred_fallthru
    _
  %v11 = vld [vmem:[%s0] sm:$0xff]
  %v12 = vld [vmem:[%s0 + $0x8] sm:$0xff]
  %v13 = vld [vmem:[%s0 + $0x10] sm:$0xff]
  %v14 = vld [vmem:[%s0 + $0x18] sm:$0xff]
  %v15 = vld [vmem:[%s1] sm:$0xff]
  %v16 = vld [vmem:[%s1 + $0x8] sm:$0xff]
  %v17 = vld [vmem:[%s1 + $0x10] sm:$0xff]
  %v18 = vld [vmem:[%s1 + $0x18] sm:$0xff]
  %v19 = vmul.f32 %v11, %v15
  %v20 = vmul.f32 %v12, %v16
  %v21 = vmul.f32 %v13, %v17
  %v22 = vmul.f32 %v14, %v18
  %v23 = vadd.f32 %v19, %v20
  %v24 = vadd.f32 %v23, %v21
  %v25 = vadd.f32 %v24, %v22
  %v26 = vrot.slane %v25, 4
  %v27 = vadd.f32 %v25, %v26
  %v28 = vrot.slane %v27, 2
  %v29 = vadd.f32 %v27, %v28
  %v30 = vrot.slane %v29, 1
  %v31 = vadd.f32 %v29, %v30
  %32 = vst [vmem:[%s2] sm:$0x1] %v31
  // Predicated region
  $region10: #{lightgcn_forward.3} parent=0 // pred_check
    _
  $region11: #{lightgcn_forward.3} parent=0 // pred_check_branch
    %34 = sbr.rel (0) target = $region13
  $region12: #{lightgcn_forward.3} parent=0 // pred_region
    _
  $region13: #{lightgcn_forward.3} parent=0 // pred_fallthru
    _
  // Predicated region
  $region14: #{lightgcn_forward.3} parent=0 // pred_check
    _
  $region15: #{lightgcn_forward.3} parent=0 // pred_check_branch
    %36 = sbr.rel (0) target = $region17
  $region16: #{lightgcn_forward.3} parent=0 // pred_region
    _
  $region17: #{lightgcn_forward.3} parent=0 // pred_fallthru
    _

// kernel: lightgcn_forward.2
$region0: #{lightgcn_forward.2}
  #allocation0 [shape = 'u32[]', space=smem, size = 0x4, offset = 0x4, fixed_abs, tag = 'smem constant byte address 0x4 - core index']
  #allocation1 [shape = 'u32[144,128]{1,0:T(1,128)}', space=vmem, size = 0x12000, scoped, tag = 'internal scratch']
  #allocation2 [shape = 'bf16[32,1024]{1,0:T(8,128)(2,1)}', space=vmem, size = 0x10000, scoped, tag = 'scratch operand']
  #allocation3 [shape = 'f32[32,512]{1,0:T(8,128)}', space=vmem, size = 0x10000, scoped, tag = 'scratch operand']
  #allocation4 [shape = 's32[1]{0}', space=sflag, size = 0x4, scoped, tag = 'scoped memory for lightgcn_forward.2']
  #allocation5 [shape = 'u8[512]{0}', space=smem, size = 0x200, scoped, tag = 'prefetched SMEM operand 0']
  #allocation6 [shape = 'u8[512]{0}', space=smem, size = 0x200, scoped, tag = 'prefetched SMEM operand 1']
  #allocation7 [shape = 'u8[512]{0}', space=smem, size = 0x200, scoped, tag = 'prefetched SMEM operand 2']
  #allocation8 [shape = 'u8[512]{0}', space=smem, size = 0x200, scoped, tag = 'prefetched SMEM operand 3']
  #allocation13 [shape = 's32[]', space=sflag, size = 0x4, offset = 0, fixed_abs, tag = 'sflag constant byte address 0x0 - dummy sync flag']
  %s0 = inlined_call_operand.vmem [shape: s32[11], index: 0, kind: input, shape index: {}]
  %s1 = inlined_call_operand.vmem [shape: s32[11], index: 1, kind: input, shape index: {}]
  %s2 = inlined_call_operand.vmem [shape: s32[11], index: 2, kind: input, shape index: {}]
  %s3 = inlined_call_operand.vmem [shape: s32[11], index: 3, kind: input, shape index: {}]
  %s4 = inlined_call_operand.vmem [shape: f32[32,512], index: 4, kind: input, shape index: {}]
  %s5 = inlined_call_operand.hbm [shape: bf16[11,128,128], index: 5, kind: input, shape index: {}]
  %s6 = inlined_call_operand.vmem [shape: f32[32,512], index: 6, kind: output, shape index: {}]
  %s7 = sld [smem:[#allocation0]]
  $region122: #{lightgcn_forward.2} parent=0
    _
  %s9 = ssub.s32 1, %s7
  %s10 = scalar_select 0, %s9, %s7
  %s11 = sshll.u32 %s0, 4
  %s12 = int_to_ptr.vmem [resolvable:$true] %s11
  %14 = dma.vmem_to_smem %s12, 16, [#allocation5], [#allocation4]
  %s15 = sshll.u32 %s1, 4
  %s16 = int_to_ptr.vmem [resolvable:$true] %s15
  %18 = dma.vmem_to_smem %s16, 16, [#allocation6], [#allocation4]
  %s19 = sshll.u32 %s2, 4
  %s20 = int_to_ptr.vmem [resolvable:$true] %s19
  %22 = dma.vmem_to_smem %s20, 16, [#allocation7], [#allocation4]
  %s23 = sshll.u32 %s3, 4
  %s24 = int_to_ptr.vmem [resolvable:$true] %s23
  %26 = dma.vmem_to_smem %s24, 16, [#allocation8], [#allocation4]
  %27 = dma.done [#allocation4], 64
  %28 = sfence
  $region1: #{lightgcn_forward.2} parent=0
    #allocation9 [shape = 'u8[65536]{0}', space=vmem, size = 0x10000, scoped, tag = 'input window, operand 5']
    #allocation10 [shape = 's32[2]{0}', space=sflag, size = 0x8, scoped, tag = 'scoped memory for lightgcn_forward.2']
    #allocation11 [shape = 'u8[32768]{0}', space=vmem, size = 0x8000, scoped, tag = 'output window, operand 0']
    %29 = vsyncpa [#allocation10], 0
    %s30 = scalar_lea.sflag [#allocation10], 1
    %31 = vsyncpa %s30, 0
    loop: start=0, step=1, limit=35
    $region2: #{lightgcn_forward.2} parent=1 // loop_pre_header
      _
    $region3: #{lightgcn_forward.2} parent=1 // loop_header
      %s33 = sphi 0, %s37
      %p34 = scmp.ge.s32.totalorder %s33, 35
      %s40 = sphi 0, %s52
      %s41 = sphi 0, %s48
      %s42 = sphi 0, %s40
      %s43 = sphi 0, %s41
      %s44 = sphi 0, %s42
      %s45 = sphi 0, %s43
      %s55 = sphi 0, %s57
      %s58 = sphi 0, %s55
      %s59 = sphi 0, %s58
      %s75 = sphi 0, %s59
      %s83 = sphi 0, %s85
      %s86 = sphi 0, %s83
      %s87 = sphi 0, %s86
      %s103 = sphi 0, %s87
    $region4: #{lightgcn_forward.2} parent=1 // loop_header_branch
      %36 = sbr.rel (%p34) target = $region8
    $region5: #{lightgcn_forward.2} parent=1 // loop_body
      %s38 = ssub.s32 %s33, 1
      %s39 = ssub.s32 %s33, 2
      %s46 = sadd.s32 1, %s41
      %p47 = scmp.ge.s32.totalorder %s46, 11
      %s48 = scalar_select %p47, 0, %s46
      %s49 = sadd.s32 1, %s40
      %s50 = scalar_select %p47, %s49, %s40
      %p51 = scmp.ge.s32.totalorder %s50, 3
      %s52 = scalar_select %p51, 0, %s50
      %s53 = ssub.s32 %s41, %s48
      %p54 = scmp.eq.s32.totalorder %s53, 0
      %s56 = sadd.s32 %s55, 1
      %s57 = scalar_select %p54, %s55, %s56
      %p60 = pneg %p54
      %p61 = scmp.eq.s32.totalorder %s33, 32
      %p62 = por %p60, %p61
      %p63 = scmp.ne.s32.totalorder %s55, %s58
      %p64 = scmp.eq.s32.totalorder %s33, 0
      %p65 = por %p63, %p64
      %p66 = scmp.ne.s32.totalorder %s55, %s58
      %p67 = scmp.eq.s32.totalorder %s38, 32
      %p68 = por %p66, %p67
      %p69 = scmp.ne.s32.totalorder %s58, %s59
      %p70 = scmp.eq.s32.totalorder %s38, 0
      %p71 = por %p69, %p70
      %p72 = scmp.ne.s32.totalorder %s58, %s59
      %p73 = scmp.eq.s32.totalorder %s39, 32
      %p74 = por %p72, %p73
      %p76 = scmp.ne.s32.totalorder %s59, %s75
      %p77 = scmp.eq.s32.totalorder %s39, 0
      %p78 = por %p76, %p77
      %s79 = sld [smem:[#allocation6 + %s41]]
      %s80 = sld [smem:[#allocation6 + %s48]]
      %s81 = ssub.s32 %s79, %s80
      %p82 = scmp.eq.s32.totalorder %s81, 0
      %s84 = sadd.s32 %s83, 1
      %s85 = scalar_select %p82, %s83, %s84
      %p88 = pneg %p82
      %p89 = scmp.eq.s32.totalorder %s33, 32
      %p90 = por %p88, %p89
      %p91 = scmp.ne.s32.totalorder %s83, %s86
      %p92 = scmp.eq.s32.totalorder %s33, 0
      %p93 = por %p91, %p92
      %p94 = scmp.ne.s32.totalorder %s83, %s86
      %p95 = scmp.eq.s32.totalorder %s38, 32
      %p96 = por %p94, %p95
      %p97 = scmp.ne.s32.totalorder %s86, %s87
      %p98 = scmp.eq.s32.totalorder %s38, 0
      %p99 = por %p97, %p98
      %p100 = scmp.ne.s32.totalorder %s86, %s87
      %p101 = scmp.eq.s32.totalorder %s39, 32
      %p102 = por %p100, %p101
      %p104 = scmp.ne.s32.totalorder %s87, %s103
      %p105 = scmp.eq.s32.totalorder %s39, 0
      %p106 = por %p104, %p105
      %p107 = scmp.le.s32.totalorder 1, %s33
      %p108 = scmp.lt.s32.totalorder %s33, 34
      %p109 = pnand %p107, %p108
      %p110 = pneg %p109
      // Predicated region
      $region9: #{lightgcn_forward.2} parent=5 // pred_check
        _
      $region10: #{lightgcn_forward.2} parent=5 // pred_check_branch
        %112 = sbr.rel (%p109) target = $region12
      $region11: #{lightgcn_forward.2} parent=5 // pred_region
        %s113 = ssub.s32 %s33, 1
      $region12: #{lightgcn_forward.2} parent=5 // pred_fallthru
        _
      %p114 = scmp.lt.s32.totalorder %s33, 33
      // Predicated region
      $region13: #{lightgcn_forward.2} parent=5 // pred_check
        %p115 = pneg %p114
      $region14: #{lightgcn_forward.2} parent=5 // pred_check_branch
        %117 = sbr.rel (%p115) target = $region16
      $region15: #{lightgcn_forward.2} parent=5 // pred_region
        // Predicated region
        $region17: #{lightgcn_forward.2} parent=15 // pred_check
          %p118 = pneg %p65
        $region18: #{lightgcn_forward.2} parent=15 // pred_check_branch
          %120 = sbr.rel (%p118) target = $region20
        $region19: #{lightgcn_forward.2} parent=15 // pred_region
          %s121 = sand.u32 %s55, 1
          %s122 = scalar_lea.sflag [#allocation10], %s121
          %s123 = sand.u32 %s55, 1
          %s124 = smul.addr %s123, 64
          %s125 = scalar_lea.vmem [#allocation9], %s124
          %s127 = ssub.s32 1024, 1024
          %128 = vsyncadd %s122, %s127
          %s129 = smul.addr %s41, 16
          %s130 = smul.addr %s129, 64
          %s131 = scalar_lea.hbm %s5, %s130
          %s132 = sshll.u32 %s125, 4
          %s133 = int_to_ptr.vmem [resolvable:$true] %s132
          %138 = dma.hbm_to_vmem [thread:$0]  %s131, 1024, %s133, %s122, 64, 64, 4
        $region20: #{lightgcn_forward.2} parent=15 // pred_fallthru
          _
      $region16: #{lightgcn_forward.2} parent=5 // pred_fallthru
        _
      %p139 = scmp.le.s32.totalorder 1, %s33
      %p140 = scmp.lt.s32.totalorder %s33, 34
      %p141 = pnand %p139, %p140
      %p142 = pneg %p141
      // Predicated region
      $region21: #{lightgcn_forward.2} parent=5 // pred_check
        _
      $region22: #{lightgcn_forward.2} parent=5 // pred_check_branch
        %144 = sbr.rel (%p141) target = $region24
      $region23: #{lightgcn_forward.2} parent=5 // pred_region
        %s145 = ssub.s32 %s33, 1
        %s146 = sand.u32 %s58, 1
        %s147 = scalar_lea.sflag [#allocation10], %s146
        %s148 = sand.u32 %s58, 1
        %s149 = smul.addr %s148, 64
        %s150 = scalar_lea.vmem [#allocation9], %s149
        // Predicated region
        $region25: #{lightgcn_forward.2} parent=23 // pred_check
          %p151 = pneg %p71
        $region26: #{lightgcn_forward.2} parent=23 // pred_check_branch
          %153 = sbr.rel (%p151) target = $region28
        $region27: #{lightgcn_forward.2} parent=23 // pred_region
          %154 = dma.done %s147, 1024
        $region28: #{lightgcn_forward.2} parent=23 // pred_fallthru
          _
        %s155 = sand.u32 %s58, 1
        %s156 = scalar_lea.sflag [#allocation10], %s155
        %s157 = sand.u32 %s58, 1
        %s158 = smul.addr %s157, 64
        %s159 = scalar_lea.vmem [#allocation9], %s158
        %p160 = pneg %p71
        %p161 = pneg %p68
        %p162 = pneg %p99
        %p163 = pneg %p96
        %s164 = sand.u32 %s86, 1
        %s165 = sand.u32 %s86, 1
        %s166 = smul.addr %s165, 32
        %s167 = scalar_lea.vmem [#allocation11], %s166
        %s168 = sld [smem:[#allocation6 + %s43]]
        %p170 = scmp.eq.s32.totalorder %s42, 0
        %p171 = scmp.eq.s32.totalorder %s43, 0
        %p172 = pnand %p170, %p171
        %p173 = pneg %p172
        // Predicated region
        $region29: #{lightgcn_forward.2} parent=23 // pred_check
          _
        $region30: #{lightgcn_forward.2} parent=23 // pred_check_branch
          %175 = sbr.rel (%p172) target = $region32
        $region31: #{lightgcn_forward.2} parent=23 // pred_region
          $region33: #{lightgcn_forward.2} parent=31
            #allocation12 [shape = 's32[1]{0}', space=sflag, size = 0x4, scoped, tag = 'scoped memory for lightgcn_forward.2']
            %p177 = scmp.lt.u32.totalorder 128, 8
            %p178 = pneg %p177
            // Predicated region
            $region34: #{lightgcn_forward.2} parent=33 // pred_check
              _
            $region35: #{lightgcn_forward.2} parent=33 // pred_check_branch
              %180 = sbr.rel (%p177) target = $region37
            $region36: #{lightgcn_forward.2} parent=33 // pred_region
              %s196 = sand.u32 128, 7
              %p197 = scmp.eq.s32.totalorder %s196, 0
              // Predicated region
              $region49: #{lightgcn_forward.2} parent=36 // pred_check
                %p198 = pneg %p197
              $region50: #{lightgcn_forward.2} parent=36 // pred_check_branch
                %200 = sbr.rel (%p198) target = $region52
              $region51: #{lightgcn_forward.2} parent=36 // pred_region
                loop: start=0, step=1, limit=1
                $region53: #{lightgcn_forward.2} parent=51 // loop_pre_header
                  _
                $region54: #{lightgcn_forward.2} parent=51 // loop_header
                  %s202 = sphi 0, %s206
                  %p203 = scmp.ge.s32.totalorder %s202, 1
                  %s207 = sphi %s4, %s4
                  %s208 = sphi [#allocation3], [#allocation3]
                $region55: #{lightgcn_forward.2} parent=51 // loop_header_branch
                  %205 = sbr.rel (%p203) target = $region59
                $region56: #{lightgcn_forward.2} parent=51 // loop_body
                  %v209 = vld [vmem:[%s207] sm:$0xff]
                  %210 = vst [vmem:[%s208] sm:$0xff] %v209
                  %v211 = vld [vmem:[%s207 + $0x8] sm:$0xff]
                  %212 = vst [vmem:[%s208 + $0x8] sm:$0xff] %v211
                  %v213 = vld [vmem:[%s207 + $0x10] sm:$0xff]
                  %214 = vst [vmem:[%s208 + $0x10] sm:$0xff] %v213
                  %v215 = vld [vmem:[%s207 + $0x18] sm:$0xff]
                  %216 = vst [vmem:[%s208 + $0x18] sm:$0xff] %v215
                  %v217 = vld [vmem:[%s207 + $0x20] sm:$0xff]
                  %218 = vst [vmem:[%s208 + $0x20] sm:$0xff] %v217
                  %v219 = vld [vmem:[%s207 + $0x28] sm:$0xff]
                  %220 = vst [vmem:[%s208 + $0x28] sm:$0xff] %v219
                  %v221 = vld [vmem:[%s207 + $0x30] sm:$0xff]
                  %222 = vst [vmem:[%s208 + $0x30] sm:$0xff] %v221
                  %v223 = vld [vmem:[%s207 + $0x38] sm:$0xff]
                  %224 = vst [vmem:[%s208 + $0x38] sm:$0xff] %v223
                  %v225 = vld [vmem:[%s207 + $0x40] sm:$0xff]
                  %226 = vst [vmem:[%s208 + $0x40] sm:$0xff] %v225
                  %v227 = vld [vmem:[%s207 + $0x48] sm:$0xff]
                  %228 = vst [vmem:[%s208 + $0x48] sm:$0xff] %v227
                  %v229 = vld [vmem:[%s207 + $0x50] sm:$0xff]
                  %230 = vst [vmem:[%s208 + $0x50] sm:$0xff] %v229
                  %v231 = vld [vmem:[%s207 + $0x58] sm:$0xff]
                  %232 = vst [vmem:[%s208 + $0x58] sm:$0xff] %v231
                  %v233 = vld [vmem:[%s207 + $0x60] sm:$0xff]
                  %234 = vst [vmem:[%s208 + $0x60] sm:$0xff] %v233
                  %v235 = vld [vmem:[%s207 + $0x68] sm:$0xff]
                  %236 = vst [vmem:[%s208 + $0x68] sm:$0xff] %v235
                  %v237 = vld [vmem:[%s207 + $0x70] sm:$0xff]
                  %238 = vst [vmem:[%s208 + $0x70] sm:$0xff] %v237
                  %v239 = vld [vmem:[%s207 + $0x78] sm:$0xff]
                  %240 = vst [vmem:[%s208 + $0x78] sm:$0xff] %v239
                $region57: #{lightgcn_forward.2} parent=51 // loop_footer
                  %s206 = sadd.s32 1, %s202
                $region58: #{lightgcn_forward.2} parent=51 // loop_footer_branch
                  %201 = sbr.rel target = $region54
                $region59: #{lightgcn_forward.2} parent=51 // loop_exit
                  _
              $region52: #{lightgcn_forward.2} parent=36 // pred_fallthru
                _
              %p241 = pneg %p197
              // Predicated region
              $region60: #{lightgcn_forward.2} parent=36 // pred_check
                _
              $region61: #{lightgcn_forward.2} parent=36 // pred_check_branch
                %243 = sbr.rel (%p197) target = $region63
              $region62: #{lightgcn_forward.2} parent=36 // pred_region
                %s244 = sand.u32 128, 7
              $region63: #{lightgcn_forward.2} parent=36 // pred_fallthru
                _
            $region37: #{lightgcn_forward.2} parent=33 // pred_fallthru
              _
            // Predicated region
            $region38: #{lightgcn_forward.2} parent=33 // pred_check
              %p181 = pneg %p177
            $region39: #{lightgcn_forward.2} parent=33 // pred_check_branch
              %183 = sbr.rel (%p181) target = $region41
            $region40: #{lightgcn_forward.2} parent=33 // pred_region
              %s184 = sshll.u32 1, 128
              %s185 = ssub.s32 %s184, 1
              loop: start=0, step=1, limit=1
              $region42: #{lightgcn_forward.2} parent=40 // loop_pre_header
                _
              $region43: #{lightgcn_forward.2} parent=40 // loop_header
                %s187 = sphi 0, %s191
                %p188 = scmp.ge.s32.totalorder %s187, 1
                %s192 = sphi %s4, %s4
                %s193 = sphi [#allocation3], [#allocation3]
              $region44: #{lightgcn_forward.2} parent=40 // loop_header_branch
                %190 = sbr.rel (%p188) target = $region48
              $region45: #{lightgcn_forward.2} parent=40 // loop_body
                %v194 = vld [vmem:[%s192] sm:%s185]
                %195 = vst [vmem:[%s193] sm:%s185] %v194
              $region46: #{lightgcn_forward.2} parent=40 // loop_footer
                %s191 = sadd.s32 1, %s187
              $region47: #{lightgcn_forward.2} parent=40 // loop_footer_branch
                %186 = sbr.rel target = $region43
              $region48: #{lightgcn_forward.2} parent=40 // loop_exit
                _
            $region41: #{lightgcn_forward.2} parent=33 // pred_fallthru
              _
            // Predicated region
            $region64: #{lightgcn_forward.2} parent=33 // pred_check
              _
            $region65: #{lightgcn_forward.2} parent=33 // pred_check_branch
              %247 = sbr.rel (0) target = $region67
            $region66: #{lightgcn_forward.2} parent=33 // pred_region
              %248 = vsyncadd [#allocation12], 2048
            $region67: #{lightgcn_forward.2} parent=33 // pred_fallthru
              _
            %s249 = smul.u32 8, 4
            %s250 = smul.u32 %s249, 4
            %s251 = sshll.u32 %s250, 4
            %252 = dma.done [#allocation12], %s251
          %v253 = vld [vmem:[#allocation3] sm:$0xff]
          %v254 = vld [vmem:[#allocation3 + $0x8] sm:$0xff]
          %v255 = vld [vmem:[#allocation3 + $0x10] sm:$0xff]
          %v256 = vld [vmem:[#allocation3 + $0x18] sm:$0xff]
          %v257 = vld [vmem:[#allocation3 + $0x20] sm:$0xff]
          %v258 = vld [vmem:[#allocation3 + $0x28] sm:$0xff]
          %v259 = vld [vmem:[#allocation3 + $0x30] sm:$0xff]
          %v260 = vld [vmem:[#allocation3 + $0x38] sm:$0xff]
          %v261 = vld [vmem:[#allocation3 + $0x40] sm:$0xff]
          %v262 = vld [vmem:[#allocation3 + $0x48] sm:$0xff]
          %v263 = vld [vmem:[#allocation3 + $0x50] sm:$0xff]
          %v264 = vld [vmem:[#allocation3 + $0x58] sm:$0xff]
          %v265 = vld [vmem:[#allocation3 + $0x60] sm:$0xff]
          %v266 = vld [vmem:[#allocation3 + $0x68] sm:$0xff]
          %v267 = vld [vmem:[#allocation3 + $0x70] sm:$0xff]
          %v268 = vld [vmem:[#allocation3 + $0x78] sm:$0xff]
          %v269 = vpack.c.bf16 %v257, %v253
          %v270 = vpack.c.bf16 %v258, %v254
          %v271 = vpack.c.bf16 %v259, %v255
          %v272 = vpack.c.bf16 %v260, %v256
          %v273 = vpack.c.bf16 %v265, %v261
          %v274 = vpack.c.bf16 %v266, %v262
          %v275 = vpack.c.bf16 %v267, %v263
          %v276 = vpack.c.bf16 %v268, %v264
          %v285 = vunpack.c.l.b16 %v269
          %v286 = vunpack.c.l.b16 %v270
          %v287 = vunpack.c.l.b16 %v271
          %v288 = vunpack.c.l.b16 %v272
          %v289 = vunpack.c.h.b16 %v269
          %v290 = vunpack.c.h.b16 %v270
          %v291 = vunpack.c.h.b16 %v271
          %v292 = vunpack.c.h.b16 %v272
          %v293 = vunpack.c.l.b16 %v273
          %v294 = vunpack.c.l.b16 %v274
          %v295 = vunpack.c.l.b16 %v275
          %v296 = vunpack.c.l.b16 %v276
          %v297 = vunpack.c.h.b16 %v273
          %v298 = vunpack.c.h.b16 %v274
          %v299 = vunpack.c.h.b16 %v275
          %v300 = vunpack.c.h.b16 %v276
          %v301 = vpack.c.b16 %v286, %v285
          %v302 = vpack.c.b16 %v288, %v287
          %v303 = vpack.c.b16 %v290, %v289
          %v304 = vpack.c.b16 %v292, %v291
          %v305 = vpack.c.b16 %v294, %v293
          %v306 = vpack.c.b16 %v296, %v295
          %v307 = vpack.c.b16 %v298, %v297
          %v308 = vpack.c.b16 %v300, %v299
          %317 = vst [vmem:[#allocation2] sm:$0xff] %v301
          %318 = vst [vmem:[#allocation2 + $0x8] sm:$0xff] %v302
          %319 = vst [vmem:[#allocation2 + $0x20] sm:$0xff] %v303
          %320 = vst [vmem:[#allocation2 + $0x28] sm:$0xff] %v304
          %321 = vst [vmem:[#allocation2 + $0x40] sm:$0xff] %v305
          %322 = vst [vmem:[#allocation2 + $0x48] sm:$0xff] %v306
          %323 = vst [vmem:[#allocation2 + $0x60] sm:$0xff] %v307
          %324 = vst [vmem:[#allocation2 + $0x68] sm:$0xff] %v308
        $region32: #{lightgcn_forward.2} parent=23 // pred_fallthru
          _
        %s325 = sld [smem:[#allocation5 + %s43]]
        %s326 = sld [smem:[#allocation6 + %s43]]
        %s327 = sld [smem:[#allocation7 + %s43]]
        %p328 = scmp.eq.s32.totalorder %s327, 1
        // Predicated region
        $region68: #{lightgcn_forward.2} parent=23 // pred_check
          %p329 = pneg %p328
        $region69: #{lightgcn_forward.2} parent=23 // pred_check_branch
          %331 = sbr.rel (%p329) target = $region71
        $region70: #{lightgcn_forward.2} parent=23 // pred_region
          %332 = vst [vmem:[%s167] sm:$0xff] 0.0
          %333 = vst [vmem:[%s167 + $0x8] sm:$0xff] 0.0
          %334 = vst [vmem:[%s167 + $0x10] sm:$0xff] 0.0
          %335 = vst [vmem:[%s167 + $0x18] sm:$0xff] 0.0
        $region71: #{lightgcn_forward.2} parent=23 // pred_fallthru
          _
        %p336 = scmp.lt.s32.totalorder %s42, 0
        %s337 = ssub.s32 0, %s42
        %s338 = scalar_select %p336, %s337, %s42
        %s339 = sand.u32 %s338, 1
        %s340 = ssub.s32 0, %s339
        %s341 = scalar_select %p336, %s340, %s339
        %p342 = scmp.ne.s32.totalorder %s341, 0
        %p343 = scmp.lt.s32.totalorder %s341, 0
        %p344 = pnand %p343, %p342
        %p345 = pneg %p344
        %s346 = sadd.s32 %s341, 2
        %s347 = scalar_select %p345, %s346, %s341
        %s348 = smul.u32 %s347, 512
        %s349 = smul.u32 %s325, 128
        %s350 = sadd.s32 %s348, %s349
        %s351 = sshra.s32 %s350, 7
        %s352 = sand.u32 %s350, 127
        %s353 = smul.addr %s351, 4
        %s354 = scalar_lea.vmem [#allocation2], %s353
        %v355 = vld [vmem:[%s354] sm:$0xf]
        %v356 = vld [vmem:[%s354 + $0x20] sm:$0xf]
        %v357 = vld [vmem:[%s354 + $0x40] sm:$0xf]
        %v358 = vld [vmem:[%s354 + $0x60] sm:$0xf]
        %v359 = vld [vmem:[%s167] sm:$0xff]
        %v360 = vld [vmem:[%s167 + $0x8] sm:$0xff]
        %v361 = vld [vmem:[%s167 + $0x10] sm:$0xff]
        %v362 = vld [vmem:[%s167 + $0x18] sm:$0xff]
        %v363 = vld [vmem:[%s150] sm:$0xf]
        %v364 = vld [vmem:[%s150 + $0x4] sm:$0xf]
        %v365 = vld [vmem:[%s150 + $0x8] sm:$0xf]
        %v366 = vld [vmem:[%s150 + $0xc] sm:$0xf]
        %v367 = vld [vmem:[%s150 + $0x10] sm:$0xf]
        %v368 = vld [vmem:[%s150 + $0x14] sm:$0xf]
        %v369 = vld [vmem:[%s150 + $0x18] sm:$0xf]
        %v370 = vld [vmem:[%s150 + $0x1c] sm:$0xf]
        %v371 = vld [vmem:[%s150 + $0x20] sm:$0xf]
        %v372 = vld [vmem:[%s150 + $0x24] sm:$0xf]
        %v373 = vld [vmem:[%s150 + $0x28] sm:$0xf]
        %v374 = vld [vmem:[%s150 + $0x2c] sm:$0xf]
        %v375 = vld [vmem:[%s150 + $0x30] sm:$0xf]
        %v376 = vld [vmem:[%s150 + $0x34] sm:$0xf]
        %v377 = vld [vmem:[%s150 + $0x38] sm:$0xf]
        %v378 = vld [vmem:[%s150 + $0x3c] sm:$0xf]
        %v383 = vunpack.c.l.b16 %v355
        %v384 = vunpack.c.l.b16 %v356
        %v385 = vunpack.c.l.b16 %v357
        %v386 = vunpack.c.l.b16 %v358
        %v387 = vpack.c.b16 %v384, %v383
        %v388 = vpack.c.b16 %v386, %v385
        %v407 = vunpack.c.l.b16 %v363
        %v408 = vunpack.c.l.b16 %v364
        %v409 = vunpack.c.l.b16 %v365
        %v410 = vunpack.c.l.b16 %v366
        %v411 = vunpack.c.l.b16 %v367
        %v412 = vunpack.c.l.b16 %v368
        %v413 = vunpack.c.l.b16 %v369
        %v414 = vunpack.c.l.b16 %v370
        %v415 = vunpack.c.l.b16 %v371
        %v416 = vunpack.c.l.b16 %v372
        %v417 = vunpack.c.l.b16 %v373
        %v418 = vunpack.c.l.b16 %v374
        %v419 = vunpack.c.l.b16 %v375
        %v420 = vunpack.c.l.b16 %v376
        %v421 = vunpack.c.l.b16 %v377
        %v422 = vunpack.c.l.b16 %v378
        %v423 = vpack.c.b16 %v408, %v407
        %v424 = vpack.c.b16 %v410, %v409
        %v425 = vpack.c.b16 %v412, %v411
        %v426 = vpack.c.b16 %v414, %v413
        %v427 = vpack.c.b16 %v416, %v415
        %v428 = vpack.c.b16 %v418, %v417
        %v429 = vpack.c.b16 %v420, %v419
        %v430 = vpack.c.b16 %v422, %v421
        %439 = vmatprep.subr.bf16.mxu0 0
        %440 = vmatpush1.bf16.msra.mxu0 %v430
        %441 = vmatprep.subr.bf16.mxu0 0
        %442 = vmatpush1.bf16.msra.mxu0 %v429
        %443 = vmatprep.subr.bf16.mxu0 0
        %444 = vmatpush1.bf16.msra.mxu0 %v428
        %445 = vmatprep.subr.bf16.mxu0 0
        %446 = vmatpush1.bf16.msra.mxu0 %v427
        %447 = vmatprep.subr.bf16.mxu0 0
        %448 = vmatpush1.bf16.msra.mxu0 %v426
        %449 = vmatprep.subr.bf16.mxu0 0
        %450 = vmatpush1.bf16.msra.mxu0 %v425
        %451 = vmatprep.subr.bf16.mxu0 0
        %452 = vmatpush1.bf16.msra.mxu0 %v424
        %453 = vmatprep.subr.bf16.mxu0 0
        %454 = vmatpush1.bf16.msra.mxu0 %v423
        %455 = vmatprep.subr.bf16.mxu0 0
        %456 = vmatpush2.bf16.msra.mxu0 0
        %457 = vmatprep.subr.bf16.mxu0 0
        %458 = vmatpush2.bf16.msra.mxu0 0
        %459 = vmatprep.subr.bf16.mxu0 0
        %460 = vmatpush2.bf16.msra.mxu0 0
        %461 = vmatprep.subr.bf16.mxu0 0
        %462 = vmatpush2.bf16.msra.mxu0 0
        %463 = vmatprep.subr.bf16.mxu0 0
        %464 = vmatpush2.bf16.msra.mxu0 0
        %465 = vmatprep.subr.bf16.mxu0 0
        %466 = vmatpush2.bf16.msra.mxu0 0
        %467 = vmatprep.subr.bf16.mxu0 0
        %468 = vmatpush2.bf16.msra.mxu0 0
        %469 = vmatprep.subr.bf16.mxu0 0
        %470 = vmatpush2.bf16.msra.mxu0 0
        %471 = vmatprep.mubr.bf16.mxu0 0
        %472 = vmatmul.mubr.bf16.gmra.mxu0 %v387
        %v473 = vpop.f32.mrf.mxu0
        %v474 = vadd.f32 0.0, %v473
        %v475 = vpop.f32.mrf.mxu0
        %v476 = vpop.f32.mrf.mxu0
        %v477 = vadd.f32 0.0, %v476
        %v478 = vpop.f32.mrf.mxu0
        %479 = vmatprep.mubr.bf16.mxu0 0
        %480 = vmatmul.mubr.bf16.gmra.mxu0 %v388
        %v481 = vpop.f32.mrf.mxu0
        %v482 = vadd.f32 0.0, %v481
        %v483 = vpop.f32.mrf.mxu0
        %v484 = vpop.f32.mrf.mxu0
        %v485 = vadd.f32 0.0, %v484
        %v486 = vpop.f32.mrf.mxu0
        %487 = vdwg.mxu0
        %v488 = vadd.f32 %v359, %v474
        %v489 = vadd.f32 %v360, %v477
        %v490 = vadd.f32 %v361, %v482
        %v491 = vadd.f32 %v362, %v485
        %492 = vst [vmem:[%s167] sm:$0xff] %v488
        %493 = vst [vmem:[%s167 + $0x8] sm:$0xff] %v489
        %494 = vst [vmem:[%s167 + $0x10] sm:$0xff] %v490
        %495 = vst [vmem:[%s167 + $0x18] sm:$0xff] %v491
        %s496 = sld [smem:[#allocation8 + %s43]]
        %p497 = scmp.eq.s32.totalorder %s496, 1
        // Predicated region
        $region72: #{lightgcn_forward.2} parent=23 // pred_check
          %p498 = pneg %p497
        $region73: #{lightgcn_forward.2} parent=23 // pred_check_branch
          %500 = sbr.rel (%p498) target = $region75
        $region74: #{lightgcn_forward.2} parent=23 // pred_region
          %v501 = vld [vmem:[%s167] sm:$0xff]
          %v502 = vld [vmem:[%s167 + $0x8] sm:$0xff]
          %v503 = vld [vmem:[%s167 + $0x10] sm:$0xff]
          %v504 = vld [vmem:[%s167 + $0x18] sm:$0xff]
          %s505 = sadd.s32 %s42, 1
          %p506 = scmp.lt.s32.totalorder %s505, 0
          %s507 = ssub.s32 0, %s505
          %s508 = scalar_select %p506, %s507, %s505
          %s509 = sand.u32 %s508, 1
          %s510 = ssub.s32 0, %s509
          %s511 = scalar_select %p506, %s510, %s509
          %p512 = scmp.ne.s32.totalorder %s511, 0
          %p513 = scmp.lt.s32.totalorder %s511, 0
          %p514 = pnand %p513, %p512
          %p515 = pneg %p514
          %s516 = sadd.s32 %s511, 2
          %s517 = scalar_select %p515, %s516, %s511
          %s518 = smul.u32 %s517, 512
          %s519 = smul.u32 %s326, 128
          %s520 = sadd.s32 %s518, %s519
          %v521 = vpack.c.bf16 %v502, %v501
          %v522 = vpack.c.bf16 %v504, %v503
          %v525 = vunpack.c.l.b16 %v521
          %v526 = vunpack.c.h.b16 %v521
          %v527 = vunpack.c.l.b16 %v522
          %v528 = vunpack.c.h.b16 %v522
          %v529 = vpack.c.b16 %v525, %v525
          %v530 = vpack.c.b16 %v526, %v526
          %v531 = vpack.c.b16 %v527, %v527
          %v532 = vpack.c.b16 %v528, %v528
          %s537 = sshra.s32 %s520, 7
          %s538 = sand.u32 %s520, 127
          %s539 = smul.addr %s537, 4
          %s540 = scalar_lea.vmem [#allocation2], %s539
          %541 = vst [vmem:[%s540] sm:$0xf] %v529
          %542 = vst [vmem:[%s540 + $0x20] sm:$0xf] %v530
          %543 = vst [vmem:[%s540 + $0x40] sm:$0xf] %v531
          %544 = vst [vmem:[%s540 + $0x60] sm:$0xf] %v532
          %s545 = sshra.s32 %s519, 7
          %s546 = sand.u32 %s519, 127
          %s547 = smul.addr %s545, 8
          %s548 = scalar_lea.vmem [#allocation3], %s547
          %v549 = vld [vmem:[%s548] sm:$0xff]
          %v550 = vld [vmem:[%s548 + $0x20] sm:$0xff]
          %v551 = vld [vmem:[%s548 + $0x40] sm:$0xff]
          %v552 = vld [vmem:[%s548 + $0x60] sm:$0xff]
          %v553 = vadd.f32 %v549, %v501
          %v554 = vadd.f32 %v550, %v502
          %v555 = vadd.f32 %v551, %v503
          %v556 = vadd.f32 %v552, %v504
          %557 = vst [vmem:[%s548] sm:$0xff] %v553
          %558 = vst [vmem:[%s548 + $0x20] sm:$0xff] %v554
          %559 = vst [vmem:[%s548 + $0x40] sm:$0xff] %v555
          %560 = vst [vmem:[%s548 + $0x60] sm:$0xff] %v556
          %v561 = vmul.f32 %v553, 0.25
          %v562 = vmul.f32 %v554, 0.25
          %v563 = vmul.f32 %v555, 0.25
          %v564 = vmul.f32 %v556, 0.25
          %565 = vst [vmem:[%s167] sm:$0xff] %v561
          %566 = vst [vmem:[%s167 + $0x8] sm:$0xff] %v562
          %567 = vst [vmem:[%s167 + $0x10] sm:$0xff] %v563
          %568 = vst [vmem:[%s167 + $0x18] sm:$0xff] %v564
        $region75: #{lightgcn_forward.2} parent=23 // pred_fallthru
          _
        %s569 = sand.u32 %s86, 1
        %s570 = sand.u32 %s86, 1
        %s571 = smul.addr %s570, 32
        %s572 = scalar_lea.vmem [#allocation11], %s571
        // Predicated region
        $region76: #{lightgcn_forward.2} parent=23 // pred_check
          %p573 = pneg %p96
        $region77: #{lightgcn_forward.2} parent=23 // pred_check_branch
          %575 = sbr.rel (%p573) target = $region79
        $region78: #{lightgcn_forward.2} parent=23 // pred_region
          %s576 = sld [smem:[#allocation6 + %s43]]
          %s577 = smul.addr %s576, 8
          %s578 = scalar_lea.vmem %s6, %s577
          // Predicated region
          $region80: #{lightgcn_forward.2} parent=78 // pred_check
            _
          $region81: #{lightgcn_forward.2} parent=78 // pred_check_branch
            %580 = sbr.rel (0) target = $region83
          $region82: #{lightgcn_forward.2} parent=78 // pred_region
            // Predicated region
            $region84: #{lightgcn_forward.2} parent=82 // pred_check
              _
            $region85: #{lightgcn_forward.2} parent=82 // pred_check_branch
              %582 = sbr.rel (0) target = $region87
            $region86: #{lightgcn_forward.2} parent=82 // pred_region
              // Predicated region
              $region99: #{lightgcn_forward.2} parent=86 // pred_check
                _
              $region100: #{lightgcn_forward.2} parent=86 // pred_check_branch
                %604 = sbr.rel (0) target = $region102
              $region101: #{lightgcn_forward.2} parent=86 // pred_region
                loop: start=0, step=1, limit=1
                $region103: #{lightgcn_forward.2} parent=101 // loop_pre_header
                  _
                $region104: #{lightgcn_forward.2} parent=101 // loop_header
                  %s606 = sphi 0, %s610
                  %p607 = scmp.ge.s32.totalorder %s606, 1
                  %s611 = sphi %s572, %s572
                  %s612 = sphi %s578, %s578
                $region105: #{lightgcn_forward.2} parent=101 // loop_header_branch
                  %609 = sbr.rel (%p607) target = $region109
                $region106: #{lightgcn_forward.2} parent=101 // loop_body
                  %v613 = vld [vmem:[%s611] sm:$0xff]
                  %614 = vst [vmem:[%s612] sm:$0xff] %v613
                  %v615 = vld [vmem:[%s611 + $0x8] sm:$0xff]
                  %616 = vst [vmem:[%s612 + $0x20] sm:$0xff] %v615
                  %v617 = vld [vmem:[%s611 + $0x10] sm:$0xff]
                  %618 = vst [vmem:[%s612 + $0x40] sm:$0xff] %v617
                  %v619 = vld [vmem:[%s611 + $0x18] sm:$0xff]
                  %620 = vst [vmem:[%s612 + $0x60] sm:$0xff] %v619
                $region107: #{lightgcn_forward.2} parent=101 // loop_footer
                  %s610 = sadd.s32 1, %s606
                $region108: #{lightgcn_forward.2} parent=101 // loop_footer_branch
                  %605 = sbr.rel target = $region104
                $region109: #{lightgcn_forward.2} parent=101 // loop_exit
                  _
              $region102: #{lightgcn_forward.2} parent=86 // pred_fallthru
                _
              // Predicated region
              $region110: #{lightgcn_forward.2} parent=86 // pred_check
                _
              $region111: #{lightgcn_forward.2} parent=86 // pred_check_branch
                %622 = sbr.rel target = $region113
              $region112: #{lightgcn_forward.2} parent=86 // pred_region
                _
              $region113: #{lightgcn_forward.2} parent=86 // pred_fallthru
                _
            $region87: #{lightgcn_forward.2} parent=82 // pred_fallthru
              _
            // Predicated region
            $region88: #{lightgcn_forward.2} parent=82 // pred_check
              _
            $region89: #{lightgcn_forward.2} parent=82 // pred_check_branch
              %584 = sbr.rel target = $region91
            $region90: #{lightgcn_forward.2} parent=82 // pred_region
              %s586 = ssub.s32 256, 1
              loop: start=0, step=1, limit=1
              $region92: #{lightgcn_forward.2} parent=90 // loop_pre_header
                _
              $region93: #{lightgcn_forward.2} parent=90 // loop_header
                %s588 = sphi 0, %s592
                %p589 = scmp.ge.s32.totalorder %s588, 1
                %s593 = sphi %s572, %s572
                %s594 = sphi %s578, %s578
              $region94: #{lightgcn_forward.2} parent=90 // loop_header_branch
                %591 = sbr.rel (%p589) target = $region98
              $region95: #{lightgcn_forward.2} parent=90 // loop_body
                %v595 = vld [vmem:[%s593] sm:%s586]
                %596 = vst [vmem:[%s594] sm:%s586] %v595
                %v597 = vld [vmem:[%s593 + $0x8] sm:%s586]
                %598 = vst [vmem:[%s594 + $0x20] sm:%s586] %v597
                %v599 = vld [vmem:[%s593 + $0x10] sm:%s586]
                %600 = vst [vmem:[%s594 + $0x40] sm:%s586] %v599
                %v601 = vld [vmem:[%s593 + $0x18] sm:%s586]
                %602 = vst [vmem:[%s594 + $0x60] sm:%s586] %v601
              $region96: #{lightgcn_forward.2} parent=90 // loop_footer
                %s592 = sadd.s32 1, %s588
              $region97: #{lightgcn_forward.2} parent=90 // loop_footer_branch
                %587 = sbr.rel target = $region93
              $region98: #{lightgcn_forward.2} parent=90 // loop_exit
                _
            $region91: #{lightgcn_forward.2} parent=82 // pred_fallthru
              _
          $region83: #{lightgcn_forward.2} parent=78 // pred_fallthru
            _
          %623 = vnop
        $region79: #{lightgcn_forward.2} parent=23 // pred_fallthru
          _
      $region24: #{lightgcn_forward.2} parent=5 // pred_fallthru
        _
      %p624 = scmp.le.s32.totalorder 2, %s33
      // Predicated region
      $region114: #{lightgcn_forward.2} parent=5 // pred_check
        %p625 = pneg %p624
      $region115: #{lightgcn_forward.2} parent=5 // pred_check_branch
        %627 = sbr.rel (%p625) target = $region117
      $region116: #{lightgcn_forward.2} parent=5 // pred_region
        %s628 = ssub.s32 %s33, 2
        // Predicated region
        $region118: #{lightgcn_forward.2} parent=116 // pred_check
          %p629 = pneg %p102
        $region119: #{lightgcn_forward.2} parent=116 // pred_check_branch
          %631 = sbr.rel (%p629) target = $region121
        $region120: #{lightgcn_forward.2} parent=116 // pred_region
          %s632 = sand.u32 %s87, 1
          %s633 = sand.u32 %s87, 1
          %s634 = smul.addr %s633, 32
          %s635 = scalar_lea.vmem [#allocation11], %s634
        $region121: #{lightgcn_forward.2} parent=116 // pred_fallthru
          _
      $region117: #{lightgcn_forward.2} parent=5 // pred_fallthru
        _
    $region6: #{lightgcn_forward.2} parent=1 // loop_footer
      %s37 = sadd.s32 1, %s33
    $region7: #{lightgcn_forward.2} parent=1 // loop_footer_branch
      %32 = sbr.rel target = $region3
    $region8: #{lightgcn_forward.2} parent=1 // loop_exit
      _
    %636 = vsyncpa [#allocation10], 1
    %s637 = scalar_lea.sflag [#allocation10], 1
    %638 = vsyncpa %s637, 1

</llo_original>
